<compile_context>
chip_gen: v7x
topology: tpu7x:2x2x1
jax: 0.10.0
libtpu: 0.0.40
codegen_flags: <defaults>
</compile_context>

<pallas_src>
import functools

import jax
import jax.numpy as jnp
import numpy as np
from jax.experimental import pallas as pl
from jax.experimental.pallas import tpu as pltpu


def _gce_loss_kernel(logits_ref, targets_ref, *rest, q, k, batch, tile_b, use_weight):
    """One batch tile: target gather, GCE transform, (weight), partial sum."""
    if use_weight:
        w_ref, out_ref = rest
    else:
        (out_ref,) = rest

    logits = logits_ref[...]                              # [TILE_B, C] native dtype
    tgt = targets_ref[...]                                # [TILE_B, 1] int32

    # Per-row gather of the target-class entry: lane-iota one-hot select +
    # lane reduce (VPU select + XLU reduce; both have slack in a mem-bound kernel).
    col = jax.lax.broadcasted_iota(jnp.int32, logits.shape, 1)           # [TILE_B, C]
    sel = jnp.where(col == tgt, logits, jnp.zeros_like(logits))          # native dtype
    # Exactly one nonzero per row -> the sum is exact even in bf16; upcast after.
    yg = jnp.sum(sel, axis=1, keepdims=True).astype(jnp.float32)         # [TILE_B, 1] f32

    # GCE: (1 - Yg^q)/q - (1 - k^q)/q
    const = (1.0 - k ** q) / q                                           # python scalar
    yg_pow_q = jnp.exp(q * jnp.log(yg))                                  # Yg ** q (Yg > 0)
    loss = (1.0 - yg_pow_q) / q - const                                  # [TILE_B, 1] f32
    if use_weight:
        loss = loss * w_ref[...]                                         # [TILE_B, 1] f32

    # Tail mask: zero contributions from padded rows of the last (partial) tile.
    row = jax.lax.broadcasted_iota(jnp.int32, (tile_b, 1), 0) + pl.program_id(0) * tile_b
    loss = jnp.where(row < batch, loss, 0.0)

    out_ref[0, 0] = jnp.sum(loss)                                        # per-tile partial sum


def _choose_tile_b(batch, num_classes, itemsize, target_bytes=2 * 1024 * 1024):
    """Rows per batch tile: ~2 MiB logits blocks (double-buffered => ~4 MiB VMEM),
    a multiple of 8 sublanes, capped at the 8-padded batch size."""
    rows = max(8, (target_bytes // max(1, num_classes * itemsize)) // 8 * 8)
    b_padded = ((batch + 7) // 8) * 8
    return int(min(rows, b_padded))


def gce_loss(logits, targets, index, weight, *, q=0.3, k=0.5, split="train", tile_b=None):
    """Pallas implementation of GceLoss.forward.

    logits : [B, C] float32 or bfloat16 (expected positive, e.g. softmax probs)
    targets: [B]    int
    index  : [B]    int  (rows into the weight table; only used for split=='train')
    weight : [num_train, 1] float32 (the frozen nn.Parameter)
    """
    B, C = logits.shape
    use_weight = (split == "train")

    targets2d = targets.reshape(B, 1).astype(jnp.int32)
    if tile_b is None:
        tile_b = _choose_tile_b(B, C, logits.dtype.itemsize)
    num_tiles = (B + tile_b - 1) // tile_b

    kernel = functools.partial(
        _gce_loss_kernel, q=float(q), k=float(k), batch=B, tile_b=tile_b,
        use_weight=use_weight)

    in_specs = [
        pl.BlockSpec((tile_b, C), lambda i: (i, 0)),     # logits tile (native dtype)
        pl.BlockSpec((tile_b, 1), lambda i: (i, 0)),     # targets tile
    ]
    args = [logits, targets2d]
    bytes_accessed = B * C * logits.dtype.itemsize + B * 4 + num_tiles * 4
    if use_weight:
        w = jnp.take(weight[:, 0], index).reshape(B, 1).astype(jnp.float32)  # [B, 1]
        in_specs.append(pl.BlockSpec((tile_b, 1), lambda i: (i, 0)))
        args.append(w)
        bytes_accessed += B * 4

    partials = pl.pallas_call(
        kernel,
        grid=(num_tiles,),
        out_shape=jax.ShapeDtypeStruct((num_tiles, 1), jnp.float32),
        in_specs=in_specs,
        # Per-tile scalar partial sums go to SMEM (scalar path -> no lane padding
        # and no sub-128-lane masked vector stores).
        out_specs=pl.BlockSpec((1, 1), lambda i: (i, 0), memory_space=pltpu.SMEM),
        compiler_params=pltpu.CompilerParams(
            dimension_semantics=("parallel",)),
        cost_estimate=pl.CostEstimate(
            flops=3 * B * C,
            transcendentals=2 * B,
            bytes_accessed=int(bytes_accessed)),
    )(*args)

    # Finish the reduction in plain JAX; divide by the TRUE batch size.
    return jnp.sum(partials) / B


def _gce_loss_ref(logits, targets, index, weight, q=0.3, k=0.5, split="train"):
    """Pure-JAX reference mirroring the PyTorch module."""
    Yg = jnp.take_along_axis(logits.astype(jnp.float32), targets[:, None], axis=1)
    loss = (1.0 - Yg ** q) / q - (1.0 - k ** q) / q
    if split == "train":
        loss = loss * weight[index]
    return jnp.mean(loss)


if __name__ == "__main__":
    # Module hyperparameters.
    q, k = 0.3, 0.5
    num_train = 512            # small deterministic synthetic weight table
    B, C = 8, 32               # batch=8, num_classes=32

    # Deterministic parameter init (torch.ones(num_train, 1)).
    weight = jnp.ones((num_train, 1), dtype=jnp.float32)

    # Deterministic example inputs.
    key = jax.random.PRNGKey(0)
    k_logits, k_tgt, k_idx = jax.random.split(key, 3)
    raw = jax.random.normal(k_logits, (B, C), dtype=jnp.float32)
    logits = jax.nn.softmax(raw, axis=-1)          # positive, like GCE expects
    targets = jax.random.randint(k_tgt, (B,), 0, C, dtype=jnp.int32)
    index = jax.random.randint(k_idx, (B,), 0, num_train, dtype=jnp.int32)

    # --- f32, train split ---
    out = jax.block_until_ready(
        gce_loss(logits, targets, index, weight, q=q, k=k, split="train"))
    ref = _gce_loss_ref(logits, targets, index, weight, q=q, k=k, split="train")
    np.testing.assert_allclose(np.asarray(out), np.asarray(ref), rtol=1e-5, atol=1e-6)

    # --- eval split: kernel specialized without the weight input ---
    out_eval = jax.block_until_ready(
        gce_loss(logits, targets, index, weight, q=q, k=k, split="eval"))
    ref_eval = _gce_loss_ref(logits, targets, index, weight, q=q, k=k, split="eval")
    np.testing.assert_allclose(np.asarray(out_eval), np.asarray(ref_eval),
                               rtol=1e-5, atol=1e-6)

    # --- bf16 logits, consumed natively (no wrapper f32 cast) ---
    logits_bf16 = logits.astype(jnp.bfloat16)
    out_bf16 = jax.block_until_ready(
        gce_loss(logits_bf16, targets, index, weight, q=q, k=k, split="train"))
    ref_bf16 = _gce_loss_ref(logits_bf16, targets, index, weight, q=q, k=k, split="train")
    np.testing.assert_allclose(np.asarray(out_bf16), np.asarray(ref_bf16),
                               rtol=5e-3, atol=5e-4)

    # --- multi-tile path with a partial (tail-masked) last tile ---
    B2 = 20
    raw2 = jax.random.normal(jax.random.PRNGKey(1), (B2, C), dtype=jnp.float32)
    logits2 = jax.nn.softmax(raw2, axis=-1)
    targets2 = jax.random.randint(jax.random.PRNGKey(2), (B2,), 0, C, dtype=jnp.int32)
    index2 = jax.random.randint(jax.random.PRNGKey(3), (B2,), 0, num_train, dtype=jnp.int32)
    out2 = jax.block_until_ready(
        gce_loss(logits2, targets2, index2, weight, q=q, k=k, split="train", tile_b=8))
    ref2 = _gce_loss_ref(logits2, targets2, index2, weight, q=q, k=k, split="train")
    np.testing.assert_allclose(np.asarray(out2), np.asarray(ref2), rtol=1e-5, atol=1e-6)

    print("KERNEL_OK")
</pallas_src>

<mosaic_0001>
module attributes {stable_mosaic.version = 11 : i64} {
  func.func @_gce_loss_kernel(%arg0: i32, %arg1: memref<8x32xf32, #tpu.memory_space<vmem>>, %arg2: memref<8x1xi32, #tpu.memory_space<vmem>>, %arg3: memref<8x1xf32, #tpu.memory_space<vmem>>, %arg4: memref<1x1xf32, #tpu.memory_space<smem>>) attributes {dimension_semantics = [#tpu.dimension_semantics<parallel>], iteration_bounds = array<i64: 1>, scalar_prefetch = 0 : i64, scratch_operands = 0 : i64, tpu.core_type = #tpu.core_type<tc>, window_params = [{transform_indices = @transform_0, window_bounds = array<i64: 8, 32>}, {transform_indices = @transform_1, window_bounds = array<i64: 8, 1>}, {transform_indices = @transform_2, window_bounds = array<i64: 8, 1>}, {transform_indices = @transform_3, window_bounds = array<i64: 1, 1>}]} {
    %c0 = arith.constant 0 : index
    %c0_0 = arith.constant 0 : index
    %0 = vector.load %arg1[%c0, %c0_0] : memref<8x32xf32, #tpu.memory_space<vmem>>, vector<8x32xf32>
    %c0_1 = arith.constant 0 : index
    %c0_2 = arith.constant 0 : index
    %1 = vector.load %arg2[%c0_1, %c0_2] : memref<8x1xi32, #tpu.memory_space<vmem>>, vector<8x1xi32>
    %2 = tpu.iota {dimensions = array<i32: 1>} : vector<8x32xi32>
    %3 = vector.broadcast %1 : vector<8x1xi32> to vector<8x32xi32>
    %4 = arith.cmpi eq, %2, %3 : vector<8x32xi32>
    %cst = arith.constant 0.000000e+00 : f32
    %5 = vector.broadcast %cst : f32 to vector<8x32xf32>
    %6 = arith.select %4, %0, %5 : vector<8x32xi1>, vector<8x32xf32>
    %cst_3 = arith.constant dense<0.000000e+00> : vector<8xf32>
    %7 = vector.multi_reduction <add>, %6, %cst_3 [1] : vector<8x32xf32> to vector<8xf32>
    %8 = vector.shape_cast %7 : vector<8xf32> to vector<8x1xf32>
    %9 = math.log %8 : vector<8x1xf32>
    %cst_4 = arith.constant 3.000000e-01 : f32
    %10 = vector.broadcast %cst_4 : f32 to vector<8x1xf32>
    %11 = arith.mulf %10, %9 : vector<8x1xf32>
    %12 = math.exp %11 : vector<8x1xf32>
    %cst_5 = arith.constant 1.000000e+00 : f32
    %13 = vector.broadcast %cst_5 : f32 to vector<8x1xf32>
    %14 = arith.subf %13, %12 : vector<8x1xf32>
    %cst_6 = arith.constant 3.000000e-01 : f32
    %15 = vector.broadcast %cst_6 : f32 to vector<8x1xf32>
    %16 = arith.divf %14, %15 : vector<8x1xf32>
    %cst_7 = arith.constant 0.625825345 : f32
    %17 = vector.broadcast %cst_7 : f32 to vector<8x1xf32>
    %18 = arith.subf %16, %17 : vector<8x1xf32>
    %c0_8 = arith.constant 0 : index
    %c0_9 = arith.constant 0 : index
    %19 = vector.load %arg3[%c0_8, %c0_9] : memref<8x1xf32, #tpu.memory_space<vmem>>, vector<8x1xf32>
    %20 = arith.mulf %18, %19 : vector<8x1xf32>
    %21 = tpu.iota {dimensions = array<i32: 0>} : vector<8x1xi32>
    %c8_i32 = arith.constant 8 : i32
    %22 = arith.muli %arg0, %c8_i32 : i32
    %23 = vector.broadcast %22 : i32 to vector<8x1xi32>
    %24 = arith.addi %21, %23 : vector<8x1xi32>
    %c8_i32_10 = arith.constant 8 : i32
    %25 = vector.broadcast %c8_i32_10 : i32 to vector<8x1xi32>
    %26 = arith.cmpi slt, %24, %25 : vector<8x1xi32>
    %cst_11 = arith.constant 0.000000e+00 : f32
    %27 = vector.broadcast %cst_11 : f32 to vector<8x1xf32>
    %28 = arith.select %26, %20, %27 : vector<8x1xi1>, vector<8x1xf32>
    %29 = vector.shape_cast %28 : vector<8x1xf32> to vector<1x8x1xf32>
    %cst_12 = arith.constant dense<0.000000e+00> : vector<1xf32>
    %30 = vector.multi_reduction <add>, %29, %cst_12 [1, 2] : vector<1x8x1xf32> to vector<1xf32>
    %31 = vector.shape_cast %30 : vector<1xf32> to vector<1x1x1xf32>
    %32 = vector.extract %31[0, 0, 0] : f32 from vector<1x1x1xf32>
    %c0_13 = arith.constant 0 : index
    %c0_14 = arith.constant 0 : index
    %33 = memref.load %arg4[%c0_13, %c0_14] : memref<1x1xf32, #tpu.memory_space<smem>>
    memref.store %32, %arg4[%c0_13, %c0_14] : memref<1x1xf32, #tpu.memory_space<smem>>
    return
  }
  func.func @transform_0(%arg0: i32) -> (i32, i32) {
    %c0_i32 = arith.constant 0 : i32
    %c0_i32_0 = arith.constant 0 : i32
    return %arg0, %c0_i32 : i32, i32
  }
  func.func @transform_1(%arg0: i32) -> (i32, i32) {
    %c0_i32 = arith.constant 0 : i32
    %c0_i32_0 = arith.constant 0 : i32
    return %arg0, %c0_i32 : i32, i32
  }
  func.func @transform_2(%arg0: i32) -> (i32, i32) {
    %c0_i32 = arith.constant 0 : i32
    %c0_i32_0 = arith.constant 0 : i32
    return %arg0, %c0_i32 : i32, i32
  }
  func.func @transform_3(%arg0: i32) -> (i32, i32) {
    %c0_i32 = arith.constant 0 : i32
    %c0_i32_0 = arith.constant 0 : i32
    return %arg0, %c0_i32 : i32, i32
  }
}

</mosaic_0001>

<llo_original>
// kernel: tpu_custom_call.1
$region0: #{tpu_custom_call.1}
  #allocation0 [shape = 'u32[]', space=smem, size = 0x4, offset = 0x4, fixed_abs, tag = 'smem constant byte address 0x4 - core index']
  #allocation1 [shape = 'u32[144,128]{1,0:T(1,128)}', space=vmem, size = 0x12000, scoped, tag = 'internal scratch']
  %s0 = inlined_call_operand.vmem [shape: f32[8,32], index: 0, kind: input, shape index: {}]
  %s1 = inlined_call_operand.vmem [shape: s32[8,1], index: 1, kind: input, shape index: {}]
  %s2 = inlined_call_operand.vmem [shape: f32[8,1], index: 2, kind: input, shape index: {}]
  %s3 = inlined_call_operand.hbm [shape: f32[1,1], index: 3, kind: output, shape index: {}]
  %s4 = sld [smem:[#allocation0]]
  $region22: #{tpu_custom_call.1} parent=0
    _
  %s6 = ssub.s32 1, %s4
  %s7 = scalar_select 0, %s6, %s4
  $region1: #{tpu_custom_call.1} parent=0
    #allocation2 [shape = 'u8[512]{0}', space=smem, size = 0x200, scoped, tag = 'output window, operand 0, single buffered']
    #allocation3 [shape = 's32[1]{0}', space=sflag, size = 0x4, scoped, tag = 'scoped memory for tpu_custom_call.1']
    %8 = vsyncpa [#allocation3], 0
    // Predicated region
    $region2: #{tpu_custom_call.1} parent=1 // pred_check
      _
    $region3: #{tpu_custom_call.1} parent=1 // pred_check_branch
      %10 = sbr.rel (0) target = $region5
    $region4: #{tpu_custom_call.1} parent=1 // pred_region
      _
    $region5: #{tpu_custom_call.1} parent=1 // pred_fallthru
      _
    // Predicated region
    $region6: #{tpu_custom_call.1} parent=1 // pred_check
      _
    $region7: #{tpu_custom_call.1} parent=1 // pred_check_branch
      %12 = sbr.rel (0) target = $region9
    $region8: #{tpu_custom_call.1} parent=1 // pred_region
      _
    $region9: #{tpu_custom_call.1} parent=1 // pred_fallthru
      _
    // Predicated region
    $region10: #{tpu_custom_call.1} parent=1 // pred_check
      _
    $region11: #{tpu_custom_call.1} parent=1 // pred_check_branch
      %14 = sbr.rel (0) target = $region13
    $region12: #{tpu_custom_call.1} parent=1 // pred_region
      _
    $region13: #{tpu_custom_call.1} parent=1 // pred_fallthru
      _
    %v15 = vld [vmem:[%s0] sm:$0xff]
    %v16 = vld [vmem:[%s1] sm:$0xff]
    %v17 = vlaneseq
    %v18 = vand.u32 %v17, 127
    %19 = vset.pattern.permute.xlu0 0
    %20 = vperm.xlu0 %19, %v16
    %v21 = vpop.permute.xlu0 %20
    %vm22 = vcmp.eq.s32.totalorder %v18, %v21
    %v23 = vsel %vm22, %v15, 0.0
    %vm24 = vcmask 261120
    %v25 = vsel %vm24, %v23, 0.0
    %26 = vadd.xlane.f32.xlu0 %v25
    %v27 = vpop.xlane.xlu0 %26
    %v28 = vlog2.pop %v27
    %v29 = vmul.f32 %v28, 0.6931472
    %v30 = vmul.f32 %v29, 0.3
    %v31 = vmul.f32 %v30, 1.442695
    %v32 = vpow.pop %v31
    %v33 = vsub.f32 1.0, %v32
    %v34 = vrcp.pop 0.3
    %v35 = vmul.f32 %v33, %v34
    %v36 = vsub.f32 %v35, 0.62582535
    %v37 = vld [vmem:[%s2] sm:$0xff]
    %v38 = vmul.f32 %v36, %v37
    %v39 = vlaneseq
    %v40 = vshrl.u32 %v39, 7
    %s41 = smul.u32 0, 8
    %v42 = vstv %s41
    %v43 = vadd.s32 %v40, %v42
    %vm44 = vcmp.lt.s32.totalorder %v43, 8
    %v45 = vsel %vm44, %v38, 0.0
    %vm46 = vcmask 7168
    %v47 = vsel %vm46, %v45, 0.0
    %48 = vadd.xlane.f32.xlu0 %v47
    %v49 = vpop.xlane.xlu0 %48
    %v50 = vrot.slane %v49, 4
    %v51 = vadd.f32 %v49, %v50
    %v52 = vrot.slane %v51, 2
    %v53 = vadd.f32 %v51, %v52
    %v54 = vrot.slane %v53, 1
    %v55 = vadd.f32 %v53, %v54
    %s56 = vtos %v55
    %s57 = scalar_lea.smem [#allocation2], 0
    %58 = sst [smem:[%s57]] %s56
    // Predicated region
    $region14: #{tpu_custom_call.1} parent=1 // pred_check
      _
    $region15: #{tpu_custom_call.1} parent=1 // pred_check_branch
      %60 = sbr.rel (0) target = $region17
    $region16: #{tpu_custom_call.1} parent=1 // pred_region
      %s62 = ssub.s32 16, 16
      %63 = vsyncadd [#allocation3], %s62
      %66 = dma.smem_to_hbm [#allocation2], 16, %s3, [#allocation3]
    $region17: #{tpu_custom_call.1} parent=1 // pred_fallthru
      _
    // Predicated region
    $region18: #{tpu_custom_call.1} parent=1 // pred_check
      _
    $region19: #{tpu_custom_call.1} parent=1 // pred_check_branch
      %68 = sbr.rel (0) target = $region21
    $region20: #{tpu_custom_call.1} parent=1 // pred_region
      %69 = dma.done [#allocation3], 16
    $region21: #{tpu_custom_call.1} parent=1 // pred_fallthru
      _
    %70 = sfence
    %71 = vsyncpa [#allocation3], 1

</llo_original>
